<compile_context>
chip_gen: v5e
topology: v5e:2x2
jax: 0.10.0
libtpu: 0.0.40
codegen_flags: <defaults>
</compile_context>

<pallas_src>
import jax
import jax.numpy as jnp
import numpy as np
from jax.experimental import pallas as pl
from jax.experimental.pallas import tpu as pltpu


# ----------------------------------------------------------------------------
# Fused kernel: encoders + multi-head attention over agents + output head.
# One grid step handles one batch tile for ALL agents; everything lives in VMEM.
# ----------------------------------------------------------------------------
def maac_fused_kernel(states_ref, ws_ref, bs_ref,
                      act_ref, wa_ref, ba_ref,
                      wqkv_s_ref, wqkv_a_ref, bqkv_ref,
                      headmat_ref,
                      w2s_ref, w2m_ref, b2p_ref,
                      wout_ref, bout_ref,
                      out_ref):
    f32 = jnp.float32
    A, Bt, AK = act_ref.shape          # num_agents, batch tile, A*amax
    H = ws_ref.shape[1]

    # ---------------- encoders (state once; actions as ONE block matmul) -----
    es = jnp.maximum(
        jnp.dot(states_ref[...], ws_ref[...], preferred_element_type=f32)
        + bs_ref[...], 0.0)                                            # [Bt, H]

    # block-padded actions [A*Bt, A*amax] @ stacked per-agent weights [A*amax, H]
    ea = (jnp.dot(act_ref[...].reshape(A * Bt, AK), wa_ref[...],
                  preferred_element_type=f32).reshape(A, Bt, H)
          + ba_ref[...])                                               # [A, Bt, H]
    ea = jnp.maximum(ea, 0.0)
    ea_flat = ea.reshape(A * Bt, H)                                    # [A*Bt, H]

    # ------------- fused QKV projection (sa = [es | ea], weight split) -------
    qkv_shared = (jnp.dot(es, wqkv_s_ref[...], preferred_element_type=f32)
                  + bqkv_ref[...])                                     # [Bt, 3H]
    qkv = (jnp.dot(ea_flat, wqkv_a_ref[...], preferred_element_type=f32)
           .reshape(A, Bt, 3 * H) + qkv_shared[None])                  # [A, Bt, 3H]
    q_all = qkv[:, :, 0:H]                                             # [A, Bt, H]
    k_all = qkv[:, :, H:2 * H]
    v_all = qkv[:, :, 2 * H:3 * H]

    # ----- multi-head attention via a pre-scaled block-diagonal head matrix --
    # headmat[d, d'] = 1/sqrt(hd) if head(d) == head(d') else 0, so scores are
    # already broadcast across the hd lanes of each head (single MXU op).
    prod = q_all[:, None, :, :] * k_all[None, :, :, :]                 # [A, A, Bt, H]
    scores = jnp.dot(prod.reshape(A * A * Bt, H), headmat_ref[...],
                     preferred_element_type=f32).reshape(A, A, Bt, H)
    m = jnp.max(scores, axis=1, keepdims=True)
    e = jnp.exp(scores - m)
    w = e / jnp.sum(e, axis=1, keepdims=True)                          # softmax over key agents
    attended = jnp.sum(w * v_all[None, :, :, :], axis=1)               # [A, Bt, H]

    # -------- fc2 (Wo folded into attended branch; two dots merged) + relu ---
    x_shared = (jnp.dot(es, w2s_ref[...], preferred_element_type=f32)
                + b2p_ref[...])                                        # [Bt, H]
    z = jnp.concatenate([ea_flat, attended.reshape(A * Bt, H)], axis=-1)  # [A*Bt, 2H]
    x = jnp.dot(z, w2m_ref[...], preferred_element_type=f32).reshape(A, Bt, H)
    x = jnp.maximum(x + x_shared[None], 0.0)                           # [A, Bt, H]

    # --------------- fc_out as lane reduction -> one dense store -------------
    out_ref[...] = jnp.sum(x * wout_ref[...][None], axis=-1) + bout_ref[...]


# ----------------------------------------------------------------------------
# One-time weight packing (hoisted out of the per-call path)
# ----------------------------------------------------------------------------
def pack_params(p, num_agents, num_heads, action_dims):
    H = p["Ws"].shape[1]
    assert H % num_heads == 0
    hd = H // num_heads
    A = num_agents
    amax = max(action_dims)

    # per-agent action-encoder weights stacked on the K axis (block-diagonal use)
    Wa_stacked = jnp.concatenate(
        [jnp.pad(p["Wa_list"][i], ((0, amax - action_dims[i]), (0, 0)))
         for i in range(A)], axis=0)                                   # [A*amax, H]
    ba = jnp.stack([p["ba_list"][i].reshape(1, H) for i in range(A)], axis=0)  # [A,1,H]

    # fused QKV weight split by input block (state rows / action rows)
    Wqkv = jnp.concatenate([p["Wq"], p["Wk"], p["Wv"]], axis=1)        # [2H, 3H]
    bqkv = jnp.concatenate([p["bq"], p["bk"], p["bv"]], axis=1)        # [1, 3H]
    Wqkv_s, Wqkv_a = Wqkv[:H], Wqkv[H:]

    # W2 split; fold Wo/bo into the attended branch; merge [ea | attended] dots
    W2_s, W2_a, W2_att = p["W2"][:H], p["W2"][H:2 * H], p["W2"][2 * H:]
    W2_att_f = p["Wo"] @ W2_att                                        # [H, H]
    b2p = p["b2"] + p["bo"] @ W2_att                                   # [1, H]
    W2_merged = jnp.concatenate([W2_a, W2_att_f], axis=0)              # [2H, H]

    # pre-scaled block-diagonal head-reduction matrix
    d = np.arange(H)
    headmat = jnp.asarray(
        (d[:, None] // hd == d[None, :] // hd).astype(np.float32) / np.sqrt(hd))

    return dict(Ws=p["Ws"], bs=p["bs"], Wa_stacked=Wa_stacked, ba=ba,
                Wqkv_s=Wqkv_s, Wqkv_a=Wqkv_a, bqkv=bqkv, headmat=headmat,
                W2_s=W2_s, W2_merged=W2_merged, b2p=b2p,
                Wout_t=p["Wout"].T, bout=p["bout"].reshape(1, 1))


# ----------------------------------------------------------------------------
# pallas_call wrapper (batch tiled as a "parallel" grid axis)
# ----------------------------------------------------------------------------
def _pallas_forward(states, act3d, pk, Btile):
    B, S = states.shape
    A, _, AK = act3d.shape
    H = pk["Ws"].shape[1]
    grid = (B // Btile,)

    compiler_kwargs = dict(dimension_semantics=("parallel",))
    if Btile >= 128:
        # Raise scoped-VMEM headroom for large batch tiles; stays under v7x's
        # 64 MiB physical (v5e/v6e have 128 MiB so the same value is safe).
        compiler_kwargs["vmem_limit_bytes"] = 48 * 1024 * 1024

    out = pl.pallas_call(
        maac_fused_kernel,
        out_shape=jax.ShapeDtypeStruct((A, B), jnp.float32),
        grid=grid,
        in_specs=[
            pl.BlockSpec((Btile, S), lambda bi: (bi, 0)),        # states
            pl.BlockSpec((S, H), lambda bi: (0, 0)),             # Ws
            pl.BlockSpec((1, H), lambda bi: (0, 0)),             # bs
            pl.BlockSpec((A, Btile, AK), lambda bi: (0, bi, 0)), # block-padded actions
            pl.BlockSpec((AK, H), lambda bi: (0, 0)),            # Wa stacked
            pl.BlockSpec((A, 1, H), lambda bi: (0, 0, 0)),       # ba
            pl.BlockSpec((H, 3 * H), lambda bi: (0, 0)),         # Wqkv_s
            pl.BlockSpec((H, 3 * H), lambda bi: (0, 0)),         # Wqkv_a
            pl.BlockSpec((1, 3 * H), lambda bi: (0, 0)),         # bqkv
            pl.BlockSpec((H, H), lambda bi: (0, 0)),             # headmat
            pl.BlockSpec((H, H), lambda bi: (0, 0)),             # W2_s
            pl.BlockSpec((2 * H, H), lambda bi: (0, 0)),         # W2_merged
            pl.BlockSpec((1, H), lambda bi: (0, 0)),             # b2'
            pl.BlockSpec((1, H), lambda bi: (0, 0)),             # Wout^T
            pl.BlockSpec((1, 1), lambda bi: (0, 0)),             # bout
        ],
        out_specs=pl.BlockSpec((A, Btile), lambda bi: (0, bi)),
        compiler_params=pltpu.CompilerParams(**compiler_kwargs),
    )(states, pk["Ws"], pk["bs"], act3d, pk["Wa_stacked"], pk["ba"],
      pk["Wqkv_s"], pk["Wqkv_a"], pk["bqkv"], pk["headmat"],
      pk["W2_s"], pk["W2_merged"], pk["b2p"], pk["Wout_t"], pk["bout"])

    return out.T                                                       # [B, A] (PyTorch layout)


def make_attention_critic_forward(params, num_agents, num_heads, action_dims):
    """Packs weights once; returns a jitted forward(states, *actions) -> [B, A]."""
    packed = pack_params(params, num_agents, num_heads, action_dims)
    A = num_agents
    amax = max(action_dims)

    @jax.jit
    def forward(states, *actions):
        B = states.shape[0]
        # block-padded actions: agent i occupies columns [i*amax, i*amax+dim_i)
        act3d = jnp.stack(
            [jnp.pad(actions[i],
                     ((0, 0), (i * amax, A * amax - i * amax - action_dims[i])))
             for i in range(A)], axis=0)                               # [A, B, A*amax]
        # lane-dense output tiles: 128-multiples when possible, else the full B
        # TODO(synk): sweep Btile (128-512) per generation against VMEM limits.
        Btile = 128 if (B > 128 and B % 128 == 0) else B
        return _pallas_forward(states, act3d, packed, Btile)

    return forward


# ----------------------------------------------------------------------------
# Pure-JAX reference (mirrors the PyTorch forward exactly) for verification
# ----------------------------------------------------------------------------
def reference_forward(states, actions, p, num_agents, num_heads):
    H = p["Ws"].shape[1]
    hd = H // num_heads
    B = states.shape[0]
    enc_s = jax.nn.relu(states @ p["Ws"] + p["bs"])
    enc_states = jnp.broadcast_to(enc_s[:, None, :], (B, num_agents, H))
    enc_actions = jnp.stack(
        [jax.nn.relu(actions[i] @ p["Wa_list"][i] + p["ba_list"][i])
         for i in range(num_agents)], axis=1)
    sa = jnp.concatenate([enc_states, enc_actions], axis=-1)           # [B, A, 2H]
    qvals = []
    for i in range(num_agents):
        query = sa[:, i]
        keys = sa
        q = (query @ p["Wq"] + p["bq"]).reshape(B, 1, num_heads, hd).transpose(0, 2, 1, 3)
        k = (keys @ p["Wk"] + p["bk"]).reshape(B, -1, num_heads, hd).transpose(0, 2, 1, 3)
        v = (keys @ p["Wv"] + p["bv"]).reshape(B, -1, num_heads, hd).transpose(0, 2, 1, 3)
        aw = jax.nn.softmax(jnp.einsum('bhqd,bhkd->bhqk', q, k) / np.sqrt(hd), axis=-1)
        av = jnp.einsum('bhqk,bhkd->bhqd', aw, v).transpose(0, 2, 1, 3).reshape(B, H)
        att = av @ p["Wo"] + p["bo"]
        comb = jnp.concatenate([query, att], axis=-1)
        x = jax.nn.relu(comb @ p["W2"] + p["b2"])
        qvals.append(x @ p["Wout"] + p["bout"])
    return jnp.concatenate(qvals, axis=1)


# ----------------------------------------------------------------------------
# Deterministic parameter construction (PyTorch Linear-style uniform init)
# ----------------------------------------------------------------------------
def linear_params(key, in_dim, out_dim):
    k1, k2 = jax.random.split(key)
    bound = 1.0 / np.sqrt(in_dim)
    W = jax.random.uniform(k1, (in_dim, out_dim), jnp.float32, -bound, bound)
    b = jax.random.uniform(k2, (1, out_dim), jnp.float32, -bound, bound)
    return W, b


if __name__ == "__main__":
    B = 8
    num_agents = 4
    hidden = 32
    num_heads = 4
    state_nvec = [3, 4, 5, 3, 4, 5]          # state_dim = 6
    action_dims = [5, 7, 5, 6]

    state_dim = len(state_nvec)

    root = jax.random.PRNGKey(0)
    keys = jax.random.split(root, 16)

    Ws, bs = linear_params(keys[0], state_dim, hidden)
    Wa_list, ba_list = [], []
    for i, d in enumerate(action_dims):
        W, b = linear_params(keys[1 + i], d, hidden)
        Wa_list.append(W)
        ba_list.append(b)
    Wq, bq = linear_params(keys[6], 2 * hidden, hidden)
    Wk, bk = linear_params(keys[7], 2 * hidden, hidden)
    Wv, bv = linear_params(keys[8], 2 * hidden, hidden)
    Wo, bo = linear_params(keys[9], hidden, hidden)
    W2, b2 = linear_params(keys[10], 3 * hidden, hidden)
    Wout, bout = linear_params(keys[11], hidden, 1)

    params = dict(Ws=Ws, bs=bs, Wa_list=Wa_list, ba_list=ba_list,
                  Wq=Wq, bq=bq, Wk=Wk, bk=bk, Wv=Wv, bv=bv,
                  Wo=Wo, bo=bo, W2=W2, b2=b2, Wout=Wout, bout=bout)

    states = jax.random.uniform(keys[12], (B, state_dim), jnp.float32)
    act_keys = jax.random.split(keys[13], num_agents)
    actions = [jax.random.uniform(act_keys[i], (B, action_dims[i]), jnp.float32)
               for i in range(num_agents)]

    forward = make_attention_critic_forward(params, num_agents, num_heads, action_dims)
    q_pallas = jax.block_until_ready(forward(states, *actions))

    q_ref = jax.block_until_ready(
        reference_forward(states, actions, params, num_agents, num_heads))

    assert q_pallas.shape == (B, num_agents)
    np.testing.assert_allclose(np.asarray(q_pallas), np.asarray(q_ref),
                               rtol=1e-4, atol=1e-4)
    print("KERNEL_OK")
</pallas_src>

<mosaic_0001>
module attributes {stable_mosaic.version = 11 : i64} {
  func.func @maac_fused_kernel(%arg0: i32, %arg1: memref<8x6xf32, #tpu.memory_space<vmem>>, %arg2: memref<6x32xf32, #tpu.memory_space<vmem>>, %arg3: memref<1x32xf32, #tpu.memory_space<vmem>>, %arg4: memref<4x8x28xf32, #tpu.memory_space<vmem>>, %arg5: memref<28x32xf32, #tpu.memory_space<vmem>>, %arg6: memref<4x1x32xf32, #tpu.memory_space<vmem>>, %arg7: memref<32x96xf32, #tpu.memory_space<vmem>>, %arg8: memref<32x96xf32, #tpu.memory_space<vmem>>, %arg9: memref<1x96xf32, #tpu.memory_space<vmem>>, %arg10: memref<32x32xf32, #tpu.memory_space<vmem>>, %arg11: memref<32x32xf32, #tpu.memory_space<vmem>>, %arg12: memref<64x32xf32, #tpu.memory_space<vmem>>, %arg13: memref<1x32xf32, #tpu.memory_space<vmem>>, %arg14: memref<1x32xf32, #tpu.memory_space<vmem>>, %arg15: memref<1x1xf32, #tpu.memory_space<vmem>>, %arg16: memref<4x8xf32, #tpu.memory_space<vmem>>) attributes {dimension_semantics = [#tpu.dimension_semantics<parallel>], iteration_bounds = array<i64: 1>, scalar_prefetch = 0 : i64, scratch_operands = 0 : i64, tpu.core_type = #tpu.core_type<tc>, window_params = [{transform_indices = @transform_0, window_bounds = array<i64: 8, 6>}, {pipeline_mode = #tpu.pipeline_mode<synchronous>, transform_indices = @transform_1, window_bounds = array<i64: 6, 32>}, {pipeline_mode = #tpu.pipeline_mode<synchronous>, transform_indices = @transform_2, window_bounds = array<i64: 1, 32>}, {transform_indices = @transform_3, window_bounds = array<i64: 4, 8, 28>}, {pipeline_mode = #tpu.pipeline_mode<synchronous>, transform_indices = @transform_4, window_bounds = array<i64: 28, 32>}, {pipeline_mode = #tpu.pipeline_mode<synchronous>, transform_indices = @transform_5, window_bounds = array<i64: 4, 1, 32>}, {pipeline_mode = #tpu.pipeline_mode<synchronous>, transform_indices = @transform_6, window_bounds = array<i64: 32, 96>}, {pipeline_mode = #tpu.pipeline_mode<synchronous>, transform_indices = @transform_7, window_bounds = array<i64: 32, 96>}, {pipeline_mode = #tpu.pipeline_mode<synchronous>, transform_indices = @transform_8, window_bounds = array<i64: 1, 96>}, {pipeline_mode = #tpu.pipeline_mode<synchronous>, transform_indices = @transform_9, window_bounds = array<i64: 32, 32>}, {pipeline_mode = #tpu.pipeline_mode<synchronous>, transform_indices = @transform_10, window_bounds = array<i64: 32, 32>}, {pipeline_mode = #tpu.pipeline_mode<synchronous>, transform_indices = @transform_11, window_bounds = array<i64: 64, 32>}, {pipeline_mode = #tpu.pipeline_mode<synchronous>, transform_indices = @transform_12, window_bounds = array<i64: 1, 32>}, {pipeline_mode = #tpu.pipeline_mode<synchronous>, transform_indices = @transform_13, window_bounds = array<i64: 1, 32>}, {pipeline_mode = #tpu.pipeline_mode<synchronous>, transform_indices = @transform_14, window_bounds = array<i64: 1, 1>}, {transform_indices = @transform_15, window_bounds = array<i64: 4, 8>}]} {
    %c0 = arith.constant 0 : index
    %c0_0 = arith.constant 0 : index
    %0 = vector.load %arg1[%c0, %c0_0] : memref<8x6xf32, #tpu.memory_space<vmem>>, vector<8x6xf32>
    %c0_1 = arith.constant 0 : index
    %c0_2 = arith.constant 0 : index
    %1 = vector.load %arg2[%c0_1, %c0_2] : memref<6x32xf32, #tpu.memory_space<vmem>>, vector<6x32xf32>
    %cst = arith.constant dense<0.000000e+00> : vector<8x32xf32>
    %2 = tpu.matmul %0, %1, %cst {dimension_numbers = #tpu.dot_dimension_numbers<[1], [0], [0], [1], [0, 0, 1, 1], [], []>} : vector<8x6xf32>, vector<6x32xf32>, vector<8x32xf32> -> vector<8x32xf32>
    %c0_3 = arith.constant 0 : index
    %c0_4 = arith.constant 0 : index
    %3 = vector.load %arg3[%c0_3, %c0_4] : memref<1x32xf32, #tpu.memory_space<vmem>>, vector<1x32xf32>
    %4 = vector.broadcast %3 : vector<1x32xf32> to vector<8x32xf32>
    %5 = arith.addf %2, %4 : vector<8x32xf32>
    %cst_5 = arith.constant 0.000000e+00 : f32
    %6 = vector.broadcast %cst_5 : f32 to vector<8x32xf32>
    %7 = arith.maximumf %5, %6 : vector<8x32xf32>
    %c0_6 = arith.constant 0 : index
    %c0_7 = arith.constant 0 : index
    %c0_8 = arith.constant 0 : index
    %8 = vector.load %arg4[%c0_6, %c0_7, %c0_8] : memref<4x8x28xf32, #tpu.memory_space<vmem>>, vector<4x8x28xf32>
    %9 = vector.shape_cast %8 : vector<4x8x28xf32> to vector<32x28xf32>
    %c0_9 = arith.constant 0 : index
    %c0_10 = arith.constant 0 : index
    %10 = vector.load %arg5[%c0_9, %c0_10] : memref<28x32xf32, #tpu.memory_space<vmem>>, vector<28x32xf32>
    %cst_11 = arith.constant dense<0.000000e+00> : vector<32x32xf32>
    %11 = tpu.matmul %9, %10, %cst_11 {dimension_numbers = #tpu.dot_dimension_numbers<[1], [0], [0], [1], [0, 0, 1, 1], [], []>} : vector<32x28xf32>, vector<28x32xf32>, vector<32x32xf32> -> vector<32x32xf32>
    %12 = vector.shape_cast %11 : vector<32x32xf32> to vector<4x8x32xf32>
    %c0_12 = arith.constant 0 : index
    %c0_13 = arith.constant 0 : index
    %c0_14 = arith.constant 0 : index
    %13 = vector.load %arg6[%c0_12, %c0_13, %c0_14] : memref<4x1x32xf32, #tpu.memory_space<vmem>>, vector<4x1x32xf32>
    %14 = vector.broadcast %13 : vector<4x1x32xf32> to vector<4x8x32xf32>
    %15 = arith.addf %12, %14 : vector<4x8x32xf32>
    %cst_15 = arith.constant 0.000000e+00 : f32
    %16 = vector.broadcast %cst_15 : f32 to vector<4x8x32xf32>
    %17 = arith.maximumf %15, %16 : vector<4x8x32xf32>
    %18 = vector.shape_cast %17 : vector<4x8x32xf32> to vector<32x32xf32>
    %c0_16 = arith.constant 0 : index
    %c0_17 = arith.constant 0 : index
    %19 = vector.load %arg7[%c0_16, %c0_17] : memref<32x96xf32, #tpu.memory_space<vmem>>, vector<32x96xf32>
    %cst_18 = arith.constant dense<0.000000e+00> : vector<8x96xf32>
    %20 = tpu.matmul %7, %19, %cst_18 {dimension_numbers = #tpu.dot_dimension_numbers<[1], [0], [0], [1], [0, 0, 1, 1], [], []>} : vector<8x32xf32>, vector<32x96xf32>, vector<8x96xf32> -> vector<8x96xf32>
    %c0_19 = arith.constant 0 : index
    %c0_20 = arith.constant 0 : index
    %21 = vector.load %arg9[%c0_19, %c0_20] : memref<1x96xf32, #tpu.memory_space<vmem>>, vector<1x96xf32>
    %22 = vector.broadcast %21 : vector<1x96xf32> to vector<8x96xf32>
    %23 = arith.addf %20, %22 : vector<8x96xf32>
    %c0_21 = arith.constant 0 : index
    %c0_22 = arith.constant 0 : index
    %24 = vector.load %arg8[%c0_21, %c0_22] : memref<32x96xf32, #tpu.memory_space<vmem>>, vector<32x96xf32>
    %cst_23 = arith.constant dense<0.000000e+00> : vector<32x96xf32>
    %25 = tpu.matmul %18, %24, %cst_23 {dimension_numbers = #tpu.dot_dimension_numbers<[1], [0], [0], [1], [0, 0, 1, 1], [], []>} : vector<32x32xf32>, vector<32x96xf32>, vector<32x96xf32> -> vector<32x96xf32>
    %26 = vector.shape_cast %25 : vector<32x96xf32> to vector<4x8x96xf32>
    %27 = vector.shape_cast %23 : vector<8x96xf32> to vector<1x8x96xf32>
    %28 = vector.broadcast %27 : vector<1x8x96xf32> to vector<4x8x96xf32>
    %29 = arith.addf %26, %28 : vector<4x8x96xf32>
    %30 = vector.extract_strided_slice %29 {offsets = [0, 0, 0], sizes = [4, 8, 32], strides = [1, 1, 1]} : vector<4x8x96xf32> to vector<4x8x32xf32>
    %31 = vector.extract_strided_slice %29 {offsets = [0, 0, 32], sizes = [4, 8, 32], strides = [1, 1, 1]} : vector<4x8x96xf32> to vector<4x8x32xf32>
    %32 = vector.extract_strided_slice %29 {offsets = [0, 0, 64], sizes = [4, 8, 32], strides = [1, 1, 1]} : vector<4x8x96xf32> to vector<4x8x32xf32>
    %33 = vector.shape_cast %30 : vector<4x8x32xf32> to vector<4x1x8x32xf32>
    %34 = vector.shape_cast %31 : vector<4x8x32xf32> to vector<1x4x8x32xf32>
    %35 = vector.broadcast %33 : vector<4x1x8x32xf32> to vector<4x4x8x32xf32>
    %36 = vector.broadcast %34 : vector<1x4x8x32xf32> to vector<4x4x8x32xf32>
    %37 = arith.mulf %35, %36 : vector<4x4x8x32xf32>
    %38 = vector.shape_cast %37 : vector<4x4x8x32xf32> to vector<128x32xf32>
    %c0_24 = arith.constant 0 : index
    %c0_25 = arith.constant 0 : index
    %39 = vector.load %arg10[%c0_24, %c0_25] : memref<32x32xf32, #tpu.memory_space<vmem>>, vector<32x32xf32>
    %cst_26 = arith.constant dense<0.000000e+00> : vector<128x32xf32>
    %40 = tpu.matmul %38, %39, %cst_26 {dimension_numbers = #tpu.dot_dimension_numbers<[1], [0], [0], [1], [0, 0, 1, 1], [], []>} : vector<128x32xf32>, vector<32x32xf32>, vector<128x32xf32> -> vector<128x32xf32>
    %41 = vector.shape_cast %40 : vector<128x32xf32> to vector<4x4x8x32xf32>
    %cst_27 = arith.constant dense<0xFF800000> : vector<4x8x32xf32>
    %42 = vector.multi_reduction <maximumf>, %41, %cst_27 [1] : vector<4x4x8x32xf32> to vector<4x8x32xf32>
    %43 = vector.shape_cast %42 : vector<4x8x32xf32> to vector<4x1x8x32xf32>
    %44 = vector.broadcast %43 : vector<4x1x8x32xf32> to vector<4x4x8x32xf32>
    %45 = arith.subf %41, %44 : vector<4x4x8x32xf32>
    %46 = math.exp %45 : vector<4x4x8x32xf32>
    %cst_28 = arith.constant dense<0.000000e+00> : vector<4x8x32xf32>
    %47 = vector.multi_reduction <add>, %46, %cst_28 [1] : vector<4x4x8x32xf32> to vector<4x8x32xf32>
    %48 = vector.shape_cast %47 : vector<4x8x32xf32> to vector<4x1x8x32xf32>
    %49 = vector.broadcast %48 : vector<4x1x8x32xf32> to vector<4x4x8x32xf32>
    %50 = arith.divf %46, %49 : vector<4x4x8x32xf32>
    %51 = vector.shape_cast %32 : vector<4x8x32xf32> to vector<1x4x8x32xf32>
    %52 = vector.broadcast %51 : vector<1x4x8x32xf32> to vector<4x4x8x32xf32>
    %53 = arith.mulf %50, %52 : vector<4x4x8x32xf32>
    %cst_29 = arith.constant dense<0.000000e+00> : vector<4x8x32xf32>
    %54 = vector.multi_reduction <add>, %53, %cst_29 [1] : vector<4x4x8x32xf32> to vector<4x8x32xf32>
    %c0_30 = arith.constant 0 : index
    %c0_31 = arith.constant 0 : index
    %55 = vector.load %arg11[%c0_30, %c0_31] : memref<32x32xf32, #tpu.memory_space<vmem>>, vector<32x32xf32>
    %cst_32 = arith.constant dense<0.000000e+00> : vector<8x32xf32>
    %56 = tpu.matmul %7, %55, %cst_32 {dimension_numbers = #tpu.dot_dimension_numbers<[1], [0], [0], [1], [0, 0, 1, 1], [], []>} : vector<8x32xf32>, vector<32x32xf32>, vector<8x32xf32> -> vector<8x32xf32>
    %c0_33 = arith.constant 0 : index
    %c0_34 = arith.constant 0 : index
    %57 = vector.load %arg13[%c0_33, %c0_34] : memref<1x32xf32, #tpu.memory_space<vmem>>, vector<1x32xf32>
    %58 = vector.broadcast %57 : vector<1x32xf32> to vector<8x32xf32>
    %59 = arith.addf %56, %58 : vector<8x32xf32>
    %60 = vector.shape_cast %54 : vector<4x8x32xf32> to vector<32x32xf32>
    %61 = tpu.concatenate %18, %60 in 1 : vector<32x32xf32>, vector<32x32xf32> -> vector<32x64xf32>
    %c0_35 = arith.constant 0 : index
    %c0_36 = arith.constant 0 : index
    %62 = vector.load %arg12[%c0_35, %c0_36] : memref<64x32xf32, #tpu.memory_space<vmem>>, vector<64x32xf32>
    %cst_37 = arith.constant dense<0.000000e+00> : vector<32x32xf32>
    %63 = tpu.matmul %61, %62, %cst_37 {dimension_numbers = #tpu.dot_dimension_numbers<[1], [0], [0], [1], [0, 0, 1, 1], [], []>} : vector<32x64xf32>, vector<64x32xf32>, vector<32x32xf32> -> vector<32x32xf32>
    %64 = vector.shape_cast %63 : vector<32x32xf32> to vector<4x8x32xf32>
    %65 = vector.shape_cast %59 : vector<8x32xf32> to vector<1x8x32xf32>
    %66 = vector.broadcast %65 : vector<1x8x32xf32> to vector<4x8x32xf32>
    %67 = arith.addf %64, %66 : vector<4x8x32xf32>
    %cst_38 = arith.constant 0.000000e+00 : f32
    %68 = vector.broadcast %cst_38 : f32 to vector<4x8x32xf32>
    %69 = arith.maximumf %67, %68 : vector<4x8x32xf32>
    %c0_39 = arith.constant 0 : index
    %c0_40 = arith.constant 0 : index
    %70 = vector.load %arg14[%c0_39, %c0_40] : memref<1x32xf32, #tpu.memory_space<vmem>>, vector<1x32xf32>
    %71 = vector.shape_cast %70 : vector<1x32xf32> to vector<1x1x32xf32>
    %72 = vector.broadcast %71 : vector<1x1x32xf32> to vector<4x8x32xf32>
    %73 = arith.mulf %69, %72 : vector<4x8x32xf32>
    %cst_41 = arith.constant dense<0.000000e+00> : vector<4x8xf32>
    %74 = vector.multi_reduction <add>, %73, %cst_41 [2] : vector<4x8x32xf32> to vector<4x8xf32>
    %c0_42 = arith.constant 0 : index
    %c0_43 = arith.constant 0 : index
    %75 = vector.load %arg15[%c0_42, %c0_43] : memref<1x1xf32, #tpu.memory_space<vmem>>, vector<1x1xf32>
    %76 = vector.broadcast %75 : vector<1x1xf32> to vector<4x8xf32>
    %77 = arith.addf %74, %76 : vector<4x8xf32>
    %c0_44 = arith.constant 0 : index
    %c0_45 = arith.constant 0 : index
    %78 = vector.load %arg16[%c0_44, %c0_45] : memref<4x8xf32, #tpu.memory_space<vmem>>, vector<4x8xf32>
    tpu.vector_store %arg16[%c0_44, %c0_45], %77 {strides = array<i32>} : memref<4x8xf32, #tpu.memory_space<vmem>>, vector<4x8xf32>,
    return
  }
  func.func @transform_0(%arg0: i32) -> (i32, i32) {
    %c0_i32 = arith.constant 0 : i32
    %c0_i32_0 = arith.constant 0 : i32
    return %arg0, %c0_i32 : i32, i32
  }
  func.func @transform_1(%arg0: i32) -> (i32, i32) {
    %c0_i32 = arith.constant 0 : i32
    %c0_i32_0 = arith.constant 0 : i32
    %c0_i32_1 = arith.constant 0 : i32
    return %c0_i32, %c0_i32_0 : i32, i32
  }
  func.func @transform_2(%arg0: i32) -> (i32, i32) {
    %c0_i32 = arith.constant 0 : i32
    %c0_i32_0 = arith.constant 0 : i32
    %c0_i32_1 = arith.constant 0 : i32
    return %c0_i32, %c0_i32_0 : i32, i32
  }
  func.func @transform_3(%arg0: i32) -> (i32, i32, i32) {
    %c0_i32 = arith.constant 0 : i32
    %c0_i32_0 = arith.constant 0 : i32
    %c0_i32_1 = arith.constant 0 : i32
    return %c0_i32, %arg0, %c0_i32_0 : i32, i32, i32
  }
  func.func @transform_4(%arg0: i32) -> (i32, i32) {
    %c0_i32 = arith.constant 0 : i32
    %c0_i32_0 = arith.constant 0 : i32
    %c0_i32_1 = arith.constant 0 : i32
    return %c0_i32, %c0_i32_0 : i32, i32
  }
  func.func @transform_5(%arg0: i32) -> (i32, i32, i32) {
    %c0_i32 = arith.constant 0 : i32
    %c0_i32_0 = arith.constant 0 : i32
    %c0_i32_1 = arith.constant 0 : i32
    %c0_i32_2 = arith.constant 0 : i32
    return %c0_i32, %c0_i32_0, %c0_i32_1 : i32, i32, i32
  }
  func.func @transform_6(%arg0: i32) -> (i32, i32) {
    %c0_i32 = arith.constant 0 : i32
    %c0_i32_0 = arith.constant 0 : i32
    %c0_i32_1 = arith.constant 0 : i32
    return %c0_i32, %c0_i32_0 : i32, i32
  }
  func.func @transform_7(%arg0: i32) -> (i32, i32) {
    %c0_i32 = arith.constant 0 : i32
    %c0_i32_0 = arith.constant 0 : i32
    %c0_i32_1 = arith.constant 0 : i32
    return %c0_i32, %c0_i32_0 : i32, i32
  }
  func.func @transform_8(%arg0: i32) -> (i32, i32) {
    %c0_i32 = arith.constant 0 : i32
    %c0_i32_0 = arith.constant 0 : i32
    %c0_i32_1 = arith.constant 0 : i32
    return %c0_i32, %c0_i32_0 : i32, i32
  }
  func.func @transform_9(%arg0: i32) -> (i32, i32) {
    %c0_i32 = arith.constant 0 : i32
    %c0_i32_0 = arith.constant 0 : i32
    %c0_i32_1 = arith.constant 0 : i32
    return %c0_i32, %c0_i32_0 : i32, i32
  }
  func.func @transform_10(%arg0: i32) -> (i32, i32) {
    %c0_i32 = arith.constant 0 : i32
    %c0_i32_0 = arith.constant 0 : i32
    %c0_i32_1 = arith.constant 0 : i32
    return %c0_i32, %c0_i32_0 : i32, i32
  }
  func.func @transform_11(%arg0: i32) -> (i32, i32) {
    %c0_i32 = arith.constant 0 : i32
    %c0_i32_0 = arith.constant 0 : i32
    %c0_i32_1 = arith.constant 0 : i32
    return %c0_i32, %c0_i32_0 : i32, i32
  }
  func.func @transform_12(%arg0: i32) -> (i32, i32) {
    %c0_i32 = arith.constant 0 : i32
    %c0_i32_0 = arith.constant 0 : i32
    %c0_i32_1 = arith.constant 0 : i32
    return %c0_i32, %c0_i32_0 : i32, i32
  }
  func.func @transform_13(%arg0: i32) -> (i32, i32) {
    %c0_i32 = arith.constant 0 : i32
    %c0_i32_0 = arith.constant 0 : i32
    %c0_i32_1 = arith.constant 0 : i32
    return %c0_i32, %c0_i32_0 : i32, i32
  }
  func.func @transform_14(%arg0: i32) -> (i32, i32) {
    %c0_i32 = arith.constant 0 : i32
    %c0_i32_0 = arith.constant 0 : i32
    %c0_i32_1 = arith.constant 0 : i32
    return %c0_i32, %c0_i32_0 : i32, i32
  }
  func.func @transform_15(%arg0: i32) -> (i32, i32) {
    %c0_i32 = arith.constant 0 : i32
    %c0_i32_0 = arith.constant 0 : i32
    return %c0_i32, %arg0 : i32, i32
  }
}

</mosaic_0001>

<llo_original>
// kernel: forward.1
$region0: #{forward.1}
  #allocation0 [shape = 'u32[]', space=smem, size = 0x4, offset = 0x4, fixed_abs, tag = 'smem constant byte address 0x4 - core index']
  #allocation1 [shape = 'u32[72,128]{1,0:T(1,128)}', space=vmem, size = 0x9000, scoped, tag = 'internal scratch']
  #allocation2 [shape = 'f32[1,1]{1,0:T(1,128)S(1)}', space=vmem, size = 0x200, scoped, tag = 'scoped memory for forward.1']
  %s0 = inlined_call_operand.vmem [shape: f32[8,6], index: 0, kind: input, shape index: {}]
  %s1 = inlined_call_operand.vmem [shape: f32[6,32], index: 1, kind: input, shape index: {}]
  %s2 = inlined_call_operand.vmem [shape: f32[1,32], index: 2, kind: input, shape index: {}]
  %s3 = inlined_call_operand.vmem [shape: f32[4,8,28], index: 3, kind: input, shape index: {}]
  %s4 = inlined_call_operand.hbm [shape: f32[28,32], index: 4, kind: input, shape index: {}]
  %s5 = inlined_call_operand.vmem [shape: f32[4,1,32], index: 5, kind: input, shape index: {}]
  %s6 = inlined_call_operand.hbm [shape: f32[32,96], index: 6, kind: input, shape index: {}]
  %s7 = inlined_call_operand.hbm [shape: f32[32,96], index: 7, kind: input, shape index: {}]
  %s8 = inlined_call_operand.vmem [shape: f32[1,96], index: 8, kind: input, shape index: {}]
  %s9 = inlined_call_operand.hbm [shape: f32[32,32], index: 9, kind: input, shape index: {}]
  %s10 = inlined_call_operand.hbm [shape: f32[32,32], index: 10, kind: input, shape index: {}]
  %s11 = inlined_call_operand.vmem [shape: f32[64,32], index: 11, kind: input, shape index: {}]
  %s12 = inlined_call_operand.vmem [shape: f32[1,32], index: 12, kind: input, shape index: {}]
  %s13 = inlined_call_operand.vmem [shape: f32[1,32], index: 13, kind: input, shape index: {}]
  %s14 = inlined_call_operand.<no memory space> [shape: f32[1,1], index: 14, kind: input, shape index: {}]
  %s15 = inlined_call_operand.hbm [shape: f32[4,8], index: 15, kind: output, shape index: {}]
  %s16 = sld [smem:[#allocation0]]
  $region90: #{forward.1} parent=0
    _
  %s18 = ssub.s32 1, %s16
  %s19 = scalar_select 0, %s18, %s16
  %v20 = vstv %s14
  %21 = vst [vmem:[#allocation2] sm:$0x1] %v20
  $region1: #{forward.1} parent=0
    #allocation3 [shape = 'u8[16384]{0}', space=vmem, size = 0x4000, scoped, tag = 'input window, operand 4, single buffered']
    #allocation4 [shape = 's32[1]{0}', space=sflag, size = 0x4, scoped, tag = 'scoped memory for forward.1']
    #allocation5 [shape = 's32[1]{0}', space=sflag, size = 0x4, scoped, tag = 'scoped memory for forward.1']
    #allocation6 [shape = 'u8[16384]{0}', space=vmem, size = 0x4000, scoped, tag = 'input window, operand 6, single buffered']
    #allocation7 [shape = 's32[1]{0}', space=sflag, size = 0x4, scoped, tag = 'scoped memory for forward.1']
    #allocation8 [shape = 'u8[16384]{0}', space=vmem, size = 0x4000, scoped, tag = 'input window, operand 7, single buffered']
    #allocation9 [shape = 'u8[16384]{0}', space=vmem, size = 0x4000, scoped, tag = 'input window, operand 9, single buffered']
    #allocation10 [shape = 's32[1]{0}', space=sflag, size = 0x4, scoped, tag = 'scoped memory for forward.1']
    #allocation11 [shape = 'u8[16384]{0}', space=vmem, size = 0x4000, scoped, tag = 'input window, operand 10, single buffered']
    #allocation12 [shape = 'u8[2048]{0}', space=vmem, size = 0x800, scoped, tag = 'output window, operand 0, single buffered']
    %22 = vsyncpa [#allocation4], 0
    %23 = vsyncpa [#allocation7], 0
    %24 = vsyncpa [#allocation10], 0
    %25 = vsyncpa [#allocation5], 0
    // Predicated region
    $region2: #{forward.1} parent=1 // pred_check
      _
    $region3: #{forward.1} parent=1 // pred_check_branch
      %27 = sbr.rel (0) target = $region5
    $region4: #{forward.1} parent=1 // pred_region
      _
    $region5: #{forward.1} parent=1 // pred_fallthru
      _
    // Predicated region
    $region6: #{forward.1} parent=1 // pred_check
      _
    $region7: #{forward.1} parent=1 // pred_check_branch
      %29 = sbr.rel (0) target = $region9
    $region8: #{forward.1} parent=1 // pred_region
      _
    $region9: #{forward.1} parent=1 // pred_fallthru
      _
    // Predicated region
    $region10: #{forward.1} parent=1 // pred_check
      _
    $region11: #{forward.1} parent=1 // pred_check_branch
      %31 = sbr.rel (0) target = $region13
    $region12: #{forward.1} parent=1 // pred_region
      _
    $region13: #{forward.1} parent=1 // pred_fallthru
      _
    // Predicated region
    $region14: #{forward.1} parent=1 // pred_check
      _
    $region15: #{forward.1} parent=1 // pred_check_branch
      %33 = sbr.rel (0) target = $region17
    $region16: #{forward.1} parent=1 // pred_region
      _
    $region17: #{forward.1} parent=1 // pred_fallthru
      _
    // Predicated region
    $region18: #{forward.1} parent=1 // pred_check
      _
    $region19: #{forward.1} parent=1 // pred_check_branch
      %35 = sbr.rel (0) target = $region21
    $region20: #{forward.1} parent=1 // pred_region
      %37 = vsyncadd [#allocation4], 0
      %s38 = sshll.u32 %s4, 4
      %s39 = int_to_ptr.hbm [resolvable:$true] %s38
      %s40 = sshll.u32 [#allocation3], 4
      %s41 = int_to_ptr.vmem [resolvable:$true] %s40
      %46 = dma.hbm_to_vmem [thread:$0]  %s39, 512, %s41, [#allocation4], 128, 128, 8
    $region21: #{forward.1} parent=1 // pred_fallthru
      _
    // Predicated region
    $region22: #{forward.1} parent=1 // pred_check
      _
    $region23: #{forward.1} parent=1 // pred_check_branch
      %48 = sbr.rel (0) target = $region25
    $region24: #{forward.1} parent=1 // pred_region
      _
    $region25: #{forward.1} parent=1 // pred_fallthru
      _
    // Predicated region
    $region26: #{forward.1} parent=1 // pred_check
      _
    $region27: #{forward.1} parent=1 // pred_check_branch
      %50 = sbr.rel (0) target = $region29
    $region28: #{forward.1} parent=1 // pred_region
      %52 = vsyncadd [#allocation7], 0
      %s53 = sshll.u32 %s6, 4
      %s54 = int_to_ptr.hbm [resolvable:$true] %s53
      %s55 = sshll.u32 [#allocation6], 4
      %s56 = int_to_ptr.vmem [resolvable:$true] %s55
      %61 = dma.hbm_to_vmem [thread:$0]  %s54, 512, %s56, [#allocation7], 128, 128, 8
    $region29: #{forward.1} parent=1 // pred_fallthru
      _
    // Predicated region
    $region30: #{forward.1} parent=1 // pred_check
      _
    $region31: #{forward.1} parent=1 // pred_check_branch
      %63 = sbr.rel (0) target = $region33
    $region32: #{forward.1} parent=1 // pred_region
      %65 = vsyncadd [#allocation7], 0
      %s66 = sshll.u32 %s7, 4
      %s67 = int_to_ptr.hbm [resolvable:$true] %s66
      %s68 = sshll.u32 [#allocation8], 4
      %s69 = int_to_ptr.vmem [resolvable:$true] %s68
      %74 = dma.hbm_to_vmem [thread:$0]  %s67, 512, %s69, [#allocation7], 128, 128, 8
    $region33: #{forward.1} parent=1 // pred_fallthru
      _
    // Predicated region
    $region34: #{forward.1} parent=1 // pred_check
      _
    $region35: #{forward.1} parent=1 // pred_check_branch
      %76 = sbr.rel (0) target = $region37
    $region36: #{forward.1} parent=1 // pred_region
      _
    $region37: #{forward.1} parent=1 // pred_fallthru
      _
    // Predicated region
    $region38: #{forward.1} parent=1 // pred_check
      _
    $region39: #{forward.1} parent=1 // pred_check_branch
      %78 = sbr.rel (0) target = $region41
    $region40: #{forward.1} parent=1 // pred_region
      %80 = vsyncadd [#allocation10], 0
      %s81 = sshll.u32 %s9, 4
      %s82 = int_to_ptr.hbm [resolvable:$true] %s81
      %s83 = sshll.u32 [#allocation9], 4
      %s84 = int_to_ptr.vmem [resolvable:$true] %s83
      %89 = dma.hbm_to_vmem [thread:$0]  %s82, 512, %s84, [#allocation10], 128, 128, 8
    $region41: #{forward.1} parent=1 // pred_fallthru
      _
    // Predicated region
    $region42: #{forward.1} parent=1 // pred_check
      _
    $region43: #{forward.1} parent=1 // pred_check_branch
      %91 = sbr.rel (0) target = $region45
    $region44: #{forward.1} parent=1 // pred_region
      %93 = vsyncadd [#allocation10], 0
      %s94 = sshll.u32 %s10, 4
      %s95 = int_to_ptr.hbm [resolvable:$true] %s94
      %s96 = sshll.u32 [#allocation11], 4
      %s97 = int_to_ptr.vmem [resolvable:$true] %s96
      %102 = dma.hbm_to_vmem [thread:$0]  %s95, 512, %s97, [#allocation10], 128, 128, 8
    $region45: #{forward.1} parent=1 // pred_fallthru
      _
    // Predicated region
    $region46: #{forward.1} parent=1 // pred_check
      _
    $region47: #{forward.1} parent=1 // pred_check_branch
      %104 = sbr.rel (0) target = $region49
    $region48: #{forward.1} parent=1 // pred_region
      _
    $region49: #{forward.1} parent=1 // pred_fallthru
      _
    // Predicated region
    $region50: #{forward.1} parent=1 // pred_check
      _
    $region51: #{forward.1} parent=1 // pred_check_branch
      %106 = sbr.rel (0) target = $region53
    $region52: #{forward.1} parent=1 // pred_region
      _
    $region53: #{forward.1} parent=1 // pred_fallthru
      _
    // Predicated region
    $region54: #{forward.1} parent=1 // pred_check
      _
    $region55: #{forward.1} parent=1 // pred_check_branch
      %108 = sbr.rel (0) target = $region57
    $region56: #{forward.1} parent=1 // pred_region
      _
    $region57: #{forward.1} parent=1 // pred_fallthru
      _
    // Predicated region
    $region58: #{forward.1} parent=1 // pred_check
      _
    $region59: #{forward.1} parent=1 // pred_check_branch
      %110 = sbr.rel (0) target = $region61
    $region60: #{forward.1} parent=1 // pred_region
      _
    $region61: #{forward.1} parent=1 // pred_fallthru
      _
    // Predicated region
    $region62: #{forward.1} parent=1 // pred_check
      _
    $region63: #{forward.1} parent=1 // pred_check_branch
      %112 = sbr.rel (0) target = $region65
    $region64: #{forward.1} parent=1 // pred_region
      %114 = dma.done [#allocation4], 512
    $region65: #{forward.1} parent=1 // pred_fallthru
      _
    // Predicated region
    $region66: #{forward.1} parent=1 // pred_check
      _
    $region67: #{forward.1} parent=1 // pred_check_branch
      %116 = sbr.rel (0) target = $region69
    $region68: #{forward.1} parent=1 // pred_region
      %118 = dma.done [#allocation7], 512
    $region69: #{forward.1} parent=1 // pred_fallthru
      _
    // Predicated region
    $region70: #{forward.1} parent=1 // pred_check
      _
    $region71: #{forward.1} parent=1 // pred_check_branch
      %120 = sbr.rel (0) target = $region73
    $region72: #{forward.1} parent=1 // pred_region
      %122 = dma.done [#allocation7], 512
    $region73: #{forward.1} parent=1 // pred_fallthru
      _
    // Predicated region
    $region74: #{forward.1} parent=1 // pred_check
      _
    $region75: #{forward.1} parent=1 // pred_check_branch
      %124 = sbr.rel (0) target = $region77
    $region76: #{forward.1} parent=1 // pred_region
      %126 = dma.done [#allocation10], 512
    $region77: #{forward.1} parent=1 // pred_fallthru
      _
    // Predicated region
    $region78: #{forward.1} parent=1 // pred_check
      _
    $region79: #{forward.1} parent=1 // pred_check_branch
      %128 = sbr.rel (0) target = $region81
    $region80: #{forward.1} parent=1 // pred_region
      %130 = dma.done [#allocation10], 512
    $region81: #{forward.1} parent=1 // pred_fallthru
      _
    %v131 = vld [vmem:[%s0] sm:$0xff]
    %v132 = vld [vmem:[%s1] sm:$0x3f]
    %v133 = vld [vmem:[%s2] sm:$0x1]
    %v135 = vperm.slane %v133, 0
    %vm137 = vcmask 48128
    %v139 = vsel %vm137, %v131, 0
    %vm141 = vcmask 1045504
    %v143 = vsel %vm141, %v132, 0
    %145 = vmatpush.msra.mxu0 0.0
    %146 = vmatpush.msra.mxu0 0.0
    %147 = vmatpush.msra.mxu0 0.0
    %148 = vmatpush.msra.mxu0 0.0
    %149 = vmatpush.msra.mxu0 0.0
    %150 = vmatpush.msra.mxu0 0.0
    %151 = vmatpush.msra.mxu0 0.0
    %152 = vmatpush.msra.mxu0 0.0
    %153 = vmatpush.msra.mxu0 0.0
    %154 = vmatpush.msra.mxu0 0.0
    %155 = vmatpush.msra.mxu0 0.0
    %156 = vmatpush.msra.mxu0 0.0
    %157 = vmatpush.msra.mxu0 0.0
    %158 = vmatpush.msra.mxu0 0.0
    %159 = vmatpush.msra.mxu0 0.0
    %160 = vmatpush.msra.mxu0 %v143
    %161 = vmatmul.f32.gmra.mxu0 %v139
    %v162 = vpop.f32.mrf.mxu0
    %v163 = vadd.f32 %v135, %v162
    %164 = vdwg.mxu0
    %v165 = vmax.f32 %v163, 0.0
    %v166 = vld [vmem:[%s3] sm:$0xff]
    %v167 = vld [vmem:[%s3 + $0x8] sm:$0xff]
    %v168 = vld [vmem:[%s3 + $0x10] sm:$0xff]
    %v169 = vld [vmem:[%s3 + $0x18] sm:$0xff]
    %v170 = vld [vmem:[#allocation3] sm:$0xff]
    %v171 = vld [vmem:[#allocation3 + $0x8] sm:$0xff]
    %v172 = vld [vmem:[#allocation3 + $0x10] sm:$0xff]
    %v173 = vld [vmem:[#allocation3 + $0x18] sm:$0xf]
    %vm174 = vcmask 228352
    %v176 = vsel %vm174, %v166, 0
    %v179 = vsel %vm174, %v167, 0
    %v182 = vsel %vm174, %v168, 0
    %v185 = vsel %vm174, %v169, 0
    %vm187 = vcmask 1043456
    %v189 = vsel %vm187, %v173, 0
    %191 = vmatpush.msra.mxu0 0.0
    %192 = vmatpush.msra.mxu0 0.0
    %193 = vmatpush.msra.mxu0 0.0
    %194 = vmatpush.msra.mxu0 0.0
    %195 = vmatpush.msra.mxu0 0.0
    %196 = vmatpush.msra.mxu0 0.0
    %197 = vmatpush.msra.mxu0 0.0
    %198 = vmatpush.msra.mxu0 0.0
    %199 = vmatpush.msra.mxu0 0.0
    %200 = vmatpush.msra.mxu0 0.0
    %201 = vmatpush.msra.mxu0 0.0
    %202 = vmatpush.msra.mxu0 0.0
    %203 = vmatpush.msra.mxu0 %v189
    %204 = vmatpush.msra.mxu0 %v172
    %205 = vmatpush.msra.mxu0 %v171
    %206 = vmatpush.msra.mxu0 %v170
    %207 = vmatmul.f32.gmra.mxu0 %v176
    %v208 = vpop.f32.mrf.mxu0
    %v209 = vadd.f32 0.0, %v208
    %210 = vmatmul.f32.gmra.mxu0 %v179
    %v211 = vpop.f32.mrf.mxu0
    %v212 = vadd.f32 0.0, %v211
    %213 = vmatmul.f32.gmra.mxu0 %v182
    %v214 = vpop.f32.mrf.mxu0
    %v215 = vadd.f32 0.0, %v214
    %216 = vmatmul.f32.gmra.mxu0 %v185
    %v217 = vpop.f32.mrf.mxu0
    %v218 = vadd.f32 0.0, %v217
    %219 = vdwg.mxu0
    %v220 = vld [vmem:[%s5] sm:$0x1]
    %v221 = vld [vmem:[%s5 + $0x1] sm:$0x1]
    %v222 = vld [vmem:[%s5 + $0x2] sm:$0x1]
    %v223 = vld [vmem:[%s5 + $0x3] sm:$0x1]
    %v228 = vperm.slane %v220, 0
    %v229 = vperm.slane %v221, 0
    %v230 = vperm.slane %v222, 0
    %v231 = vperm.slane %v223, 0
    %v236 = vadd.f32 %v209, %v228
    %v237 = vadd.f32 %v212, %v229
    %v238 = vadd.f32 %v215, %v230
    %v239 = vadd.f32 %v218, %v231
    %v240 = vmax.f32 %v236, 0.0
    %v241 = vmax.f32 %v237, 0.0
    %v242 = vmax.f32 %v238, 0.0
    %v243 = vmax.f32 %v239, 0.0
    %v244 = vld [vmem:[#allocation6] sm:$0xff]
    %v245 = vld [vmem:[#allocation6 + $0x8] sm:$0xff]
    %v246 = vld [vmem:[#allocation6 + $0x10] sm:$0xff]
    %v247 = vld [vmem:[#allocation6 + $0x18] sm:$0xff]
    %v248 = vld [vmem:[%s8] sm:$0x1]
    %v250 = vperm.slane %v248, 0
    %vm252 = vcmask 261120
    %v254 = vsel %vm252, %v165, 0
    %256 = vmatpush.msra.mxu0 0.0
    %257 = vmatpush.msra.mxu0 0.0
    %258 = vmatpush.msra.mxu0 0.0
    %259 = vmatpush.msra.mxu0 0.0
    %260 = vmatpush.msra.mxu0 0.0
    %261 = vmatpush.msra.mxu0 0.0
    %262 = vmatpush.msra.mxu0 0.0
    %263 = vmatpush.msra.mxu0 0.0
    %264 = vmatpush.msra.mxu0 0.0
    %265 = vmatpush.msra.mxu0 0.0
    %266 = vmatpush.msra.mxu0 0.0
    %267 = vmatpush.msra.mxu0 0.0
    %268 = vmatpush.msra.mxu0 %v247
    %269 = vmatpush.msra.mxu0 %v246
    %270 = vmatpush.msra.mxu0 %v245
    %271 = vmatpush.msra.mxu0 %v244
    %272 = vmatmul.f32.gmra.mxu0 %v254
    %v273 = vpop.f32.mrf.mxu0
    %v274 = vadd.f32 %v250, %v273
    %275 = vdwg.mxu0
    %v276 = vld [vmem:[#allocation8] sm:$0xff]
    %v277 = vld [vmem:[#allocation8 + $0x8] sm:$0xff]
    %v278 = vld [vmem:[#allocation8 + $0x10] sm:$0xff]
    %v279 = vld [vmem:[#allocation8 + $0x18] sm:$0xff]
    %v281 = vsel %vm252, %v240, 0
    %v284 = vsel %vm252, %v241, 0
    %v287 = vsel %vm252, %v242, 0
    %v290 = vsel %vm252, %v243, 0
    %292 = vmatpush.msra.mxu0 0.0
    %293 = vmatpush.msra.mxu0 0.0
    %294 = vmatpush.msra.mxu0 0.0
    %295 = vmatpush.msra.mxu0 0.0
    %296 = vmatpush.msra.mxu0 0.0
    %297 = vmatpush.msra.mxu0 0.0
    %298 = vmatpush.msra.mxu0 0.0
    %299 = vmatpush.msra.mxu0 0.0
    %300 = vmatpush.msra.mxu0 0.0
    %301 = vmatpush.msra.mxu0 0.0
    %302 = vmatpush.msra.mxu0 0.0
    %303 = vmatpush.msra.mxu0 0.0
    %304 = vmatpush.msra.mxu0 %v279
    %305 = vmatpush.msra.mxu0 %v278
    %306 = vmatpush.msra.mxu0 %v277
    %307 = vmatpush.msra.mxu0 %v276
    %308 = vmatmul.f32.gmra.mxu0 %v281
    %v309 = vpop.f32.mrf.mxu0
    %v310 = vadd.f32 0.0, %v309
    %311 = vmatmul.f32.gmra.mxu0 %v284
    %v312 = vpop.f32.mrf.mxu0
    %v313 = vadd.f32 0.0, %v312
    %314 = vmatmul.f32.gmra.mxu0 %v287
    %v315 = vpop.f32.mrf.mxu0
    %v316 = vadd.f32 0.0, %v315
    %317 = vmatmul.f32.gmra.mxu0 %v290
    %v318 = vpop.f32.mrf.mxu0
    %v319 = vadd.f32 0.0, %v318
    %320 = vdwg.mxu0
    %v321 = vadd.f32 %v310, %v274
    %v322 = vadd.f32 %v313, %v274
    %v323 = vadd.f32 %v316, %v274
    %v324 = vadd.f32 %v319, %v274
    %329 = vrot.lane.b32.xlu0 %v321, 96
    %v330 = vpop.permute.xlu0 %329
    %331 = vrot.lane.b32.xlu0 %v322, 96
    %v332 = vpop.permute.xlu0 %331
    %333 = vrot.lane.b32.xlu0 %v323, 96
    %v334 = vpop.permute.xlu0 %333
    %335 = vrot.lane.b32.xlu0 %v324, 96
    %v336 = vpop.permute.xlu0 %335
    %v341 = vmul.f32 %v321, %v330
    %v342 = vmul.f32 %v321, %v332
    %v343 = vmul.f32 %v321, %v334
    %v344 = vmul.f32 %v321, %v336
    %v345 = vmul.f32 %v322, %v330
    %v346 = vmul.f32 %v322, %v332
    %v347 = vmul.f32 %v322, %v334
    %v348 = vmul.f32 %v322, %v336
    %v349 = vmul.f32 %v323, %v330
    %v350 = vmul.f32 %v323, %v332
    %v351 = vmul.f32 %v323, %v334
    %v352 = vmul.f32 %v323, %v336
    %v353 = vmul.f32 %v324, %v330
    %v354 = vmul.f32 %v324, %v332
    %v355 = vmul.f32 %v324, %v334
    %v356 = vmul.f32 %v324, %v336
    %v357 = vld [vmem:[#allocation9] sm:$0xff]
    %v358 = vld [vmem:[#allocation9 + $0x8] sm:$0xff]
    %v359 = vld [vmem:[#allocation9 + $0x10] sm:$0xff]
    %v360 = vld [vmem:[#allocation9 + $0x18] sm:$0xff]
    %v362 = vsel %vm252, %v341, 0
    %v365 = vsel %vm252, %v342, 0
    %v368 = vsel %vm252, %v343, 0
    %v371 = vsel %vm252, %v344, 0
    %v374 = vsel %vm252, %v345, 0
    %v377 = vsel %vm252, %v346, 0
    %v380 = vsel %vm252, %v347, 0
    %v383 = vsel %vm252, %v348, 0
    %v386 = vsel %vm252, %v349, 0
    %v389 = vsel %vm252, %v350, 0
    %v392 = vsel %vm252, %v351, 0
    %v395 = vsel %vm252, %v352, 0
    %v398 = vsel %vm252, %v353, 0
    %v401 = vsel %vm252, %v354, 0
    %v404 = vsel %vm252, %v355, 0
    %v407 = vsel %vm252, %v356, 0
    %409 = vmatpush.msra.mxu0 0.0
    %410 = vmatpush.msra.mxu0 0.0
    %411 = vmatpush.msra.mxu0 0.0
    %412 = vmatpush.msra.mxu0 0.0
    %413 = vmatpush.msra.mxu0 0.0
    %414 = vmatpush.msra.mxu0 0.0
    %415 = vmatpush.msra.mxu0 0.0
    %416 = vmatpush.msra.mxu0 0.0
    %417 = vmatpush.msra.mxu0 0.0
    %418 = vmatpush.msra.mxu0 0.0
    %419 = vmatpush.msra.mxu0 0.0
    %420 = vmatpush.msra.mxu0 0.0
    %421 = vmatpush.msra.mxu0 %v360
    %422 = vmatpush.msra.mxu0 %v359
    %423 = vmatpush.msra.mxu0 %v358
    %424 = vmatpush.msra.mxu0 %v357
    %425 = vmatmul.f32.gmra.mxu0 %v362
    %v426 = vpop.f32.mrf.mxu0
    %v427 = vadd.f32 0.0, %v426
    %428 = vmatmul.f32.gmra.mxu0 %v365
    %v429 = vpop.f32.mrf.mxu0
    %v430 = vadd.f32 0.0, %v429
    %431 = vmatmul.f32.gmra.mxu0 %v368
    %v432 = vpop.f32.mrf.mxu0
    %v433 = vadd.f32 0.0, %v432
    %434 = vmatmul.f32.gmra.mxu0 %v371
    %v435 = vpop.f32.mrf.mxu0
    %v436 = vadd.f32 0.0, %v435
    %437 = vmatmul.f32.gmra.mxu0 %v374
    %v438 = vpop.f32.mrf.mxu0
    %v439 = vadd.f32 0.0, %v438
    %440 = vmatmul.f32.gmra.mxu0 %v377
    %v441 = vpop.f32.mrf.mxu0
    %v442 = vadd.f32 0.0, %v441
    %443 = vmatmul.f32.gmra.mxu0 %v380
    %v444 = vpop.f32.mrf.mxu0
    %v445 = vadd.f32 0.0, %v444
    %446 = vmatmul.f32.gmra.mxu0 %v383
    %v447 = vpop.f32.mrf.mxu0
    %v448 = vadd.f32 0.0, %v447
    %449 = vmatmul.f32.gmra.mxu0 %v386
    %v450 = vpop.f32.mrf.mxu0
    %v451 = vadd.f32 0.0, %v450
    %452 = vmatmul.f32.gmra.mxu0 %v389
    %v453 = vpop.f32.mrf.mxu0
    %v454 = vadd.f32 0.0, %v453
    %455 = vmatmul.f32.gmra.mxu0 %v392
    %v456 = vpop.f32.mrf.mxu0
    %v457 = vadd.f32 0.0, %v456
    %458 = vmatmul.f32.gmra.mxu0 %v395
    %v459 = vpop.f32.mrf.mxu0
    %v460 = vadd.f32 0.0, %v459
    %461 = vmatmul.f32.gmra.mxu0 %v398
    %v462 = vpop.f32.mrf.mxu0
    %v463 = vadd.f32 0.0, %v462
    %464 = vmatmul.f32.gmra.mxu0 %v401
    %v465 = vpop.f32.mrf.mxu0
    %v466 = vadd.f32 0.0, %v465
    %467 = vmatmul.f32.gmra.mxu0 %v404
    %v468 = vpop.f32.mrf.mxu0
    %v469 = vadd.f32 0.0, %v468
    %470 = vmatmul.f32.gmra.mxu0 %v407
    %v471 = vpop.f32.mrf.mxu0
    %v472 = vadd.f32 0.0, %v471
    %473 = vdwg.mxu0
    %v474 = vsel %vm252, %v427, -inf
    %v475 = vsel %vm252, %v430, -inf
    %v476 = vmax.f32 %v474, %v475
    %v477 = vsel %vm252, %v433, -inf
    %v478 = vmax.f32 %v476, %v477
    %v479 = vsel %vm252, %v436, -inf
    %v480 = vmax.f32 %v478, %v479
    %v481 = vsel %vm252, %v439, -inf
    %v482 = vsel %vm252, %v442, -inf
    %v483 = vmax.f32 %v481, %v482
    %v484 = vsel %vm252, %v445, -inf
    %v485 = vmax.f32 %v483, %v484
    %v486 = vsel %vm252, %v448, -inf
    %v487 = vmax.f32 %v485, %v486
    %v488 = vsel %vm252, %v451, -inf
    %v489 = vsel %vm252, %v454, -inf
    %v490 = vmax.f32 %v488, %v489
    %v491 = vsel %vm252, %v457, -inf
    %v492 = vmax.f32 %v490, %v491
    %v493 = vsel %vm252, %v460, -inf
    %v494 = vmax.f32 %v492, %v493
    %v495 = vsel %vm252, %v463, -inf
    %v496 = vsel %vm252, %v466, -inf
    %v497 = vmax.f32 %v495, %v496
    %v498 = vsel %vm252, %v469, -inf
    %v499 = vmax.f32 %v497, %v498
    %v500 = vsel %vm252, %v472, -inf
    %v501 = vmax.f32 %v499, %v500
    %v502 = vsub.f32 %v427, %v480
    %v503 = vsub.f32 %v430, %v480
    %v504 = vsub.f32 %v433, %v480
    %v505 = vsub.f32 %v436, %v480
    %v506 = vsub.f32 %v439, %v487
    %v507 = vsub.f32 %v442, %v487
    %v508 = vsub.f32 %v445, %v487
    %v509 = vsub.f32 %v448, %v487
    %v510 = vsub.f32 %v451, %v494
    %v511 = vsub.f32 %v454, %v494
    %v512 = vsub.f32 %v457, %v494
    %v513 = vsub.f32 %v460, %v494
    %v514 = vsub.f32 %v463, %v501
    %v515 = vsub.f32 %v466, %v501
    %v516 = vsub.f32 %v469, %v501
    %v517 = vsub.f32 %v472, %v501
    %v518 = vmul.f32 %v502, 1.442695
    %v519 = vpow.pop %v518
    %v520 = vmul.f32 %v503, 1.442695
    %v521 = vpow.pop %v520
    %v522 = vmul.f32 %v504, 1.442695
    %v523 = vpow.pop %v522
    %v524 = vmul.f32 %v505, 1.442695
    %v525 = vpow.pop %v524
    %v526 = vmul.f32 %v506, 1.442695
    %v527 = vpow.pop %v526
    %v528 = vmul.f32 %v507, 1.442695
    %v529 = vpow.pop %v528
    %v530 = vmul.f32 %v508, 1.442695
    %v531 = vpow.pop %v530
    %v532 = vmul.f32 %v509, 1.442695
    %v533 = vpow.pop %v532
    %v534 = vmul.f32 %v510, 1.442695
    %v535 = vpow.pop %v534
    %v536 = vmul.f32 %v511, 1.442695
    %v537 = vpow.pop %v536
    %v538 = vmul.f32 %v512, 1.442695
    %v539 = vpow.pop %v538
    %v540 = vmul.f32 %v513, 1.442695
    %v541 = vpow.pop %v540
    %v542 = vmul.f32 %v514, 1.442695
    %v543 = vpow.pop %v542
    %v544 = vmul.f32 %v515, 1.442695
    %v545 = vpow.pop %v544
    %v546 = vmul.f32 %v516, 1.442695
    %v547 = vpow.pop %v546
    %v548 = vmul.f32 %v517, 1.442695
    %v549 = vpow.pop %v548
    %v550 = vsel %vm252, %v519, 0.0
    %v551 = vsel %vm252, %v521, 0.0
    %v552 = vadd.f32 %v550, %v551
    %v553 = vsel %vm252, %v523, 0.0
    %v554 = vadd.f32 %v552, %v553
    %v555 = vsel %vm252, %v525, 0.0
    %v556 = vadd.f32 %v554, %v555
    %v557 = vsel %vm252, %v527, 0.0
    %v558 = vsel %vm252, %v529, 0.0
    %v559 = vadd.f32 %v557, %v558
    %v560 = vsel %vm252, %v531, 0.0
    %v561 = vadd.f32 %v559, %v560
    %v562 = vsel %vm252, %v533, 0.0
    %v563 = vadd.f32 %v561, %v562
    %v564 = vsel %vm252, %v535, 0.0
    %v565 = vsel %vm252, %v537, 0.0
    %v566 = vadd.f32 %v564, %v565
    %v567 = vsel %vm252, %v539, 0.0
    %v568 = vadd.f32 %v566, %v567
    %v569 = vsel %vm252, %v541, 0.0
    %v570 = vadd.f32 %v568, %v569
    %v571 = vsel %vm252, %v543, 0.0
    %v572 = vsel %vm252, %v545, 0.0
    %v573 = vadd.f32 %v571, %v572
    %v574 = vsel %vm252, %v547, 0.0
    %v575 = vadd.f32 %v573, %v574
    %v576 = vsel %vm252, %v549, 0.0
    %v577 = vadd.f32 %v575, %v576
    %v578 = vrcp.pop %v556
    %v579 = vmul.f32 %v556, %v578
    %v580 = vsub.f32 1.0, %v579
    %v581 = vmul.f32 %v578, %v580
    %v582 = vadd.f32 %v578, %v581
    %vm583 = vweird.f32 %v556
    %vm584 = vweird.f32 %v578
    %vm585 = vmor %vm583, %vm584
    %v586 = vsel %vm585, %v578, %v582
    %v587 = vand.u32 2147483647, %v556
    %vm588 = vcmp.eq.f32.partialorder %v587, 8.507059e+37
    %v589 = vand.u32 %v556, 2147483648
    %v590 = vor.u32 1.1754944e-38, %v589
    %v591 = vsel %vm588, %v590, %v586
    %v592 = vmul.f32 %v519, %v591
    %v593 = vmul.f32 %v521, %v591
    %v594 = vmul.f32 %v523, %v591
    %v595 = vmul.f32 %v525, %v591
    %v596 = vrcp.pop %v563
    %v597 = vmul.f32 %v563, %v596
    %v598 = vsub.f32 1.0, %v597
    %v599 = vmul.f32 %v596, %v598
    %v600 = vadd.f32 %v596, %v599
    %vm601 = vweird.f32 %v563
    %vm602 = vweird.f32 %v596
    %vm603 = vmor %vm601, %vm602
    %v604 = vsel %vm603, %v596, %v600
    %v605 = vand.u32 2147483647, %v563
    %vm606 = vcmp.eq.f32.partialorder %v605, 8.507059e+37
    %v607 = vand.u32 %v563, 2147483648
    %v608 = vor.u32 1.1754944e-38, %v607
    %v609 = vsel %vm606, %v608, %v604
    %v610 = vmul.f32 %v527, %v609
    %v611 = vmul.f32 %v529, %v609
    %v612 = vmul.f32 %v531, %v609
    %v613 = vmul.f32 %v533, %v609
    %v614 = vrcp.pop %v570
    %v615 = vmul.f32 %v570, %v614
    %v616 = vsub.f32 1.0, %v615
    %v617 = vmul.f32 %v614, %v616
    %v618 = vadd.f32 %v614, %v617
    %vm619 = vweird.f32 %v570
    %vm620 = vweird.f32 %v614
    %vm621 = vmor %vm619, %vm620
    %v622 = vsel %vm621, %v614, %v618
    %v623 = vand.u32 2147483647, %v570
    %vm624 = vcmp.eq.f32.partialorder %v623, 8.507059e+37
    %v625 = vand.u32 %v570, 2147483648
    %v626 = vor.u32 1.1754944e-38, %v625
    %v627 = vsel %vm624, %v626, %v622
    %v628 = vmul.f32 %v535, %v627
    %v629 = vmul.f32 %v537, %v627
    %v630 = vmul.f32 %v539, %v627
    %v631 = vmul.f32 %v541, %v627
    %v632 = vrcp.pop %v577
    %v633 = vmul.f32 %v577, %v632
    %v634 = vsub.f32 1.0, %v633
    %v635 = vmul.f32 %v632, %v634
    %v636 = vadd.f32 %v632, %v635
    %vm637 = vweird.f32 %v577
    %vm638 = vweird.f32 %v632
    %vm639 = vmor %vm637, %vm638
    %v640 = vsel %vm639, %v632, %v636
    %v641 = vand.u32 2147483647, %v577
    %vm642 = vcmp.eq.f32.partialorder %v641, 8.507059e+37
    %v643 = vand.u32 %v577, 2147483648
    %v644 = vor.u32 1.1754944e-38, %v643
    %v645 = vsel %vm642, %v644, %v640
    %v646 = vmul.f32 %v543, %v645
    %v647 = vmul.f32 %v545, %v645
    %v648 = vmul.f32 %v547, %v645
    %v649 = vmul.f32 %v549, %v645
    %650 = vrot.lane.b32.xlu0 %v321, 64
    %v651 = vpop.permute.xlu0 %650
    %652 = vrot.lane.b32.xlu0 %v322, 64
    %v653 = vpop.permute.xlu0 %652
    %654 = vrot.lane.b32.xlu0 %v323, 64
    %v655 = vpop.permute.xlu0 %654
    %656 = vrot.lane.b32.xlu0 %v324, 64
    %v657 = vpop.permute.xlu0 %656
    %v662 = vmul.f32 %v592, %v651
    %v663 = vmul.f32 %v593, %v653
    %v664 = vmul.f32 %v594, %v655
    %v665 = vmul.f32 %v595, %v657
    %v666 = vmul.f32 %v610, %v651
    %v667 = vmul.f32 %v611, %v653
    %v668 = vmul.f32 %v612, %v655
    %v669 = vmul.f32 %v613, %v657
    %v670 = vmul.f32 %v628, %v651
    %v671 = vmul.f32 %v629, %v653
    %v672 = vmul.f32 %v630, %v655
    %v673 = vmul.f32 %v631, %v657
    %v674 = vmul.f32 %v646, %v651
    %v675 = vmul.f32 %v647, %v653
    %v676 = vmul.f32 %v648, %v655
    %v677 = vmul.f32 %v649, %v657
    %v678 = vsel %vm252, %v662, 0.0
    %v679 = vsel %vm252, %v663, 0.0
    %v680 = vadd.f32 %v678, %v679
    %v681 = vsel %vm252, %v664, 0.0
    %v682 = vadd.f32 %v680, %v681
    %v683 = vsel %vm252, %v665, 0.0
    %v684 = vadd.f32 %v682, %v683
    %v685 = vsel %vm252, %v666, 0.0
    %v686 = vsel %vm252, %v667, 0.0
    %v687 = vadd.f32 %v685, %v686
    %v688 = vsel %vm252, %v668, 0.0
    %v689 = vadd.f32 %v687, %v688
    %v690 = vsel %vm252, %v669, 0.0
    %v691 = vadd.f32 %v689, %v690
    %v692 = vsel %vm252, %v670, 0.0
    %v693 = vsel %vm252, %v671, 0.0
    %v694 = vadd.f32 %v692, %v693
    %v695 = vsel %vm252, %v672, 0.0
    %v696 = vadd.f32 %v694, %v695
    %v697 = vsel %vm252, %v673, 0.0
    %v698 = vadd.f32 %v696, %v697
    %v699 = vsel %vm252, %v674, 0.0
    %v700 = vsel %vm252, %v675, 0.0
    %v701 = vadd.f32 %v699, %v700
    %v702 = vsel %vm252, %v676, 0.0
    %v703 = vadd.f32 %v701, %v702
    %v704 = vsel %vm252, %v677, 0.0
    %v705 = vadd.f32 %v703, %v704
    %v706 = vld [vmem:[#allocation11] sm:$0xff]
    %v707 = vld [vmem:[#allocation11 + $0x8] sm:$0xff]
    %v708 = vld [vmem:[#allocation11 + $0x10] sm:$0xff]
    %v709 = vld [vmem:[#allocation11 + $0x18] sm:$0xff]
    %v710 = vld [vmem:[%s12] sm:$0x1]
    %v712 = vperm.slane %v710, 0
    %714 = vmatpush.msra.mxu0 0.0
    %715 = vmatpush.msra.mxu0 0.0
    %716 = vmatpush.msra.mxu0 0.0
    %717 = vmatpush.msra.mxu0 0.0
    %718 = vmatpush.msra.mxu0 0.0
    %719 = vmatpush.msra.mxu0 0.0
    %720 = vmatpush.msra.mxu0 0.0
    %721 = vmatpush.msra.mxu0 0.0
    %722 = vmatpush.msra.mxu0 0.0
    %723 = vmatpush.msra.mxu0 0.0
    %724 = vmatpush.msra.mxu0 0.0
    %725 = vmatpush.msra.mxu0 0.0
    %726 = vmatpush.msra.mxu0 %v709
    %727 = vmatpush.msra.mxu0 %v708
    %728 = vmatpush.msra.mxu0 %v707
    %729 = vmatpush.msra.mxu0 %v706
    %730 = vmatmul.f32.gmra.mxu0 %v254
    %v731 = vpop.f32.mrf.mxu0
    %v732 = vadd.f32 %v712, %v731
    %733 = vdwg.mxu0
    %738 = vrot.lane.b32.xlu0 %v684, 32
    %v739 = vpop.permute.xlu0 %738
    %740 = vrot.lane.b32.xlu0 %v691, 32
    %v741 = vpop.permute.xlu0 %740
    %742 = vrot.lane.b32.xlu0 %v698, 32
    %v743 = vpop.permute.xlu0 %742
    %744 = vrot.lane.b32.xlu0 %v705, 32
    %v745 = vpop.permute.xlu0 %744
    %v750 = vsel %vm252, %v240, %v739
    %v751 = vsel %vm252, %v241, %v741
    %v752 = vsel %vm252, %v242, %v743
    %v753 = vsel %vm252, %v243, %v745
    %v754 = vld [vmem:[%s11] sm:$0xff]
    %v755 = vld [vmem:[%s11 + $0x8] sm:$0xff]
    %v756 = vld [vmem:[%s11 + $0x10] sm:$0xff]
    %v757 = vld [vmem:[%s11 + $0x18] sm:$0xff]
    %v758 = vld [vmem:[%s11 + $0x20] sm:$0xff]
    %v759 = vld [vmem:[%s11 + $0x28] sm:$0xff]
    %v760 = vld [vmem:[%s11 + $0x30] sm:$0xff]
    %v761 = vld [vmem:[%s11 + $0x38] sm:$0xff]
    %vm762 = vcmask 523264
    %v764 = vsel %vm762, %v750, 0
    %v767 = vsel %vm762, %v751, 0
    %v770 = vsel %vm762, %v752, 0
    %v773 = vsel %vm762, %v753, 0
    %775 = vmatpush.msra.mxu0 0.0
    %776 = vmatpush.msra.mxu0 0.0
    %777 = vmatpush.msra.mxu0 0.0
    %778 = vmatpush.msra.mxu0 0.0
    %779 = vmatpush.msra.mxu0 0.0
    %780 = vmatpush.msra.mxu0 0.0
    %781 = vmatpush.msra.mxu0 0.0
    %782 = vmatpush.msra.mxu0 0.0
    %783 = vmatpush.msra.mxu0 %v761
    %784 = vmatpush.msra.mxu0 %v760
    %785 = vmatpush.msra.mxu0 %v759
    %786 = vmatpush.msra.mxu0 %v758
    %787 = vmatpush.msra.mxu0 %v757
    %788 = vmatpush.msra.mxu0 %v756
    %789 = vmatpush.msra.mxu0 %v755
    %790 = vmatpush.msra.mxu0 %v754
    %791 = vmatmul.f32.gmra.mxu0 %v764
    %v792 = vpop.f32.mrf.mxu0
    %v793 = vadd.f32 0.0, %v792
    %794 = vmatmul.f32.gmra.mxu0 %v767
    %v795 = vpop.f32.mrf.mxu0
    %v796 = vadd.f32 0.0, %v795
    %797 = vmatmul.f32.gmra.mxu0 %v770
    %v798 = vpop.f32.mrf.mxu0
    %v799 = vadd.f32 0.0, %v798
    %800 = vmatmul.f32.gmra.mxu0 %v773
    %v801 = vpop.f32.mrf.mxu0
    %v802 = vadd.f32 0.0, %v801
    %803 = vdwg.mxu0
    %v804 = vadd.f32 %v793, %v732
    %v805 = vadd.f32 %v796, %v732
    %v806 = vadd.f32 %v799, %v732
    %v807 = vadd.f32 %v802, %v732
    %v808 = vmax.f32 %v804, 0.0
    %v809 = vmax.f32 %v805, 0.0
    %v810 = vmax.f32 %v806, 0.0
    %v811 = vmax.f32 %v807, 0.0
    %v812 = vld [vmem:[%s13] sm:$0x1]
    %v814 = vperm.slane %v812, 0
    %v816 = vmul.f32 %v808, %v814
    %v817 = vmul.f32 %v809, %v814
    %v818 = vmul.f32 %v810, %v814
    %v819 = vmul.f32 %v811, %v814
    %v820 = vsel %vm252, %v816, 0.0
    %821 = vadd.xlane.f32.xlu0 %v820
    %v822 = vpop.xlane.xlu0 %821
    %v823 = vsel %vm252, %v817, 0.0
    %824 = vadd.xlane.f32.xlu0 %v823
    %v825 = vpop.xlane.xlu0 %824
    %v826 = vsel %vm252, %v818, 0.0
    %827 = vadd.xlane.f32.xlu0 %v826
    %v828 = vpop.xlane.xlu0 %827
    %v829 = vsel %vm252, %v819, 0.0
    %830 = vadd.xlane.f32.xlu0 %v829
    %v831 = vpop.xlane.xlu0 %830
    %v832 = vld [vmem:[#allocation2] sm:$0x1]
    %v834 = vperm.slane %v832, 0
    %835 = vset.pattern.permute.xlu0 0
    %836 = vperm.xlu0 %835, %v834
    %v837 = vpop.permute.xlu0 %836
    %v839 = vadd.f32 %v822, %v837
    %v840 = vadd.f32 %v825, %v837
    %v841 = vadd.f32 %v828, %v837
    %v842 = vadd.f32 %v831, %v837
    %v847 = vlaneseq
    %v848 = vand.u32 %v847, 127
    %v849 = vperm.slane %v839, %v848
    %v850 = vperm.slane %v840, %v848
    %v851 = vperm.slane %v841, %v848
    %v852 = vperm.slane %v842, %v848
    %vm853 = vcmask 1041409
    %v854 = vsel %vm853, %v850, %v849
    %vm855 = vcmask 1042434
    %v856 = vsel %vm855, %v851, %v854
    %vm857 = vcmask 1043459
    %v858 = vsel %vm857, %v852, %v856
    %vm860 = vcmask 60416
    %861 = vst.msk [vmem:[#allocation12] sm:$0xf] %vm860, %v858
    // Predicated region
    $region82: #{forward.1} parent=1 // pred_check
      _
    $region83: #{forward.1} parent=1 // pred_check_branch
      %863 = sbr.rel (0) target = $region85
    $region84: #{forward.1} parent=1 // pred_region
      %865 = vsyncadd [#allocation5], 0
      %s867 = sshll.u32 [#allocation12], 4
      %s868 = int_to_ptr.vmem [resolvable:$true] %s867
      %s869 = sshll.u32 %s15, 4
      %s870 = int_to_ptr.hbm [resolvable:$true] %s869
      %872 = dma.vmem_to_hbm [thread:$0]  %s868, 64, %s870, [#allocation5]
    $region85: #{forward.1} parent=1 // pred_fallthru
      _
    // Predicated region
    $region86: #{forward.1} parent=1 // pred_check
      _
    $region87: #{forward.1} parent=1 // pred_check_branch
      %874 = sbr.rel (0) target = $region89
    $region88: #{forward.1} parent=1 // pred_region
      %876 = dma.done [#allocation5], 64
    $region89: #{forward.1} parent=1 // pred_fallthru
      _
    %877 = vsyncpa [#allocation4], 1
    %878 = vsyncpa [#allocation7], 1
    %879 = vsyncpa [#allocation10], 1
    %880 = vsyncpa [#allocation5], 1

</llo_original>
